<compile_context>
chip_gen: v7x
topology: tpu7x:2x2x1
jax: 0.10.0
libtpu: 0.0.40
codegen_flags: <defaults>
</compile_context>

<pallas_src>
import functools

import numpy as np
import jax
import jax.numpy as jnp
from jax.experimental import pallas as pl
from jax.experimental.pallas import tpu as pltpu


def conv1d_output_size(input_size, padding, kernel_size, stride) -> int:
    """Mirror of the reference helper (floor formula from torch docs)."""
    return int(
        np.floor((input_size + 2 * padding - 1 * (kernel_size - 1) - 1) / stride + 1)
    )


def _round_up(x, m):
    return ((x + m - 1) // m) * m


def _maxpool1d_kernel(x_ref, o_ref, *, kernel_size, stride, rows_padded):
    """One block of max pooling in the grouped/transposed layout.

    x_ref: (t_out + halo, stride * rows_padded)
           lane chunk t (t < stride) of sublane j holds input position
           j*stride + t for all N*C rows (rows live on lanes).
    o_ref: (t_out, rows_padded)
    """
    n_out = o_ref.shape[0]
    R = rows_padded
    # k = 0 chunk initializes the accumulator; remaining kernel_size-1 chunks
    # are elementwise maxima on full (n_out, R) tiles (VPU only, lane-aligned).
    acc = x_ref[0:n_out, 0:R]
    for k in range(1, kernel_size):
        q, t = divmod(k, stride)  # q > 0 only for overlapping windows (K > stride)
        acc = jnp.maximum(acc, x_ref[q:q + n_out, t * R:(t + 1) * R])
    o_ref[...] = acc


class MaxPoolLayer:
    """JAX/Pallas equivalent of the PyTorch MaxPoolLayer (no learnable params)."""

    # VMEM for one (input block + output block) pair. Pallas double-buffers,
    # so the live footprint is ~2x this; stays far below the 32 MiB scoped
    # limit requested below (and below v7x's 64 MiB physical VMEM).
    _BLOCK_BYTES_BUDGET = 8 * 1024 * 1024

    def __init__(self, kernel_size, input_len, stride=None, padding=0):
        self.kernel_size = int(kernel_size)
        self.stride = int(kernel_size if stride is None else stride)
        self.padding = int(padding)
        self.output_len = conv1d_output_size(
            input_len, self.padding, self.kernel_size, self.stride
        )
        assert self.output_len >= 1, "MaxPoolLayer: empty output"
        self._jit_forward = jax.jit(self._forward)

    def __call__(self, x):
        # x: (N, C, L) array, like torch.nn.MaxPool1d input.
        return self._jit_forward(x)

    def _forward(self, x):
        N, C, L = x.shape
        K, S, P = self.kernel_size, self.stride, self.padding
        out_len = self.output_len
        rows = N * C
        dtype = x.dtype
        itemsize = jnp.dtype(dtype).itemsize

        # Padding fill value that can never win the max (handles int dtypes too).
        if jnp.issubdtype(dtype, jnp.floating):
            fill = -jnp.inf
        else:
            fill = jnp.iinfo(dtype).min

        # ---- Layout transform (single pre-pass, fused under jit) -------------
        # Length -> sublanes, N*C rows -> lanes (padded to a multiple of 128 so
        # every store in the kernel is a full 128-lane store).
        rows_padded = _round_up(rows, 128)
        halo = (K - 1) // S              # extra sublane groups when K > stride
        n_groups = out_len + halo
        needed_len = n_groups * S        # length (in padded coords) after grouping

        xt = jnp.transpose(x, (2, 0, 1)).reshape(L, rows)          # (L, N*C)
        keep = max(0, min(L, needed_len - P))   # drop tail never covered by a window
        xt = xt[:keep]
        xe = jnp.pad(
            xt,
            ((P, needed_len - P - keep), (0, rows_padded - rows)),
            constant_values=fill,
        )                                                           # (needed_len, Rp)
        # Free reshape: lane chunk t of grouped row j holds input position j*S + t.
        xg = xe.reshape(n_groups, S * rows_padded)

        # ---- Tile the output-length axis for a pipelined grid ----------------
        bytes_per_out_row = (S + 1) * rows_padded * itemsize
        t_cap = max(8, (self._BLOCK_BYTES_BUDGET // bytes_per_out_row) // 8 * 8)
        if halo > 0 or out_len <= t_cap:
            # TODO(synk): overlapping windows (kernel_size > stride) use a single
            # length block (no length tiling); add haloed tiling if ever needed.
            t_out = out_len
        else:
            t_out = t_cap
        n_blocks = pl.cdiv(out_len, t_out)

        kernel = functools.partial(
            _maxpool1d_kernel, kernel_size=K, stride=S, rows_padded=rows_padded
        )
        out_t = pl.pallas_call(
            kernel,
            out_shape=jax.ShapeDtypeStruct((out_len, rows_padded), dtype),
            grid=(n_blocks,),
            in_specs=[
                pl.BlockSpec((t_out + halo, S * rows_padded), lambda i: (i, 0))
            ],
            out_specs=pl.BlockSpec((t_out, rows_padded), lambda i: (i, 0)),
            compiler_params=pltpu.CompilerParams(
                dimension_semantics=("parallel",),
                vmem_limit_bytes=32 * 1024 * 1024,
            ),
            cost_estimate=pl.CostEstimate(
                flops=out_len * rows_padded * max(K - 1, 1),
                transcendentals=0,
                bytes_accessed=(n_groups * S + out_len) * rows_padded * itemsize,
            ),
        )(xg)

        # ---- Back to PyTorch's (N, C, out_len) layout -------------------------
        out = out_t[:, :rows].reshape(out_len, N, C)
        return jnp.transpose(out, (1, 2, 0))


def _reference_maxpool1d(x, kernel_size, stride, padding):
    # Pure-JAX reference (same semantics as torch.nn.MaxPool1d, ceil_mode=False).
    if padding:
        x = jnp.pad(
            x, ((0, 0), (0, 0), (padding, padding)), constant_values=-jnp.inf
        )
    out_len = conv1d_output_size(
        x.shape[-1] - 2 * padding, padding, kernel_size, stride
    )
    cols = [
        jnp.max(x[..., o * stride: o * stride + kernel_size], axis=-1)
        for o in range(out_len)
    ]
    return jnp.stack(cols, axis=-1)


if __name__ == "__main__":
    key = jax.random.PRNGKey(0)
    N, C, L = 2, 4, 16
    kernel_size = 2
    x = jax.random.normal(key, (N, C, L), dtype=jnp.float32)

    # Default config (stride = kernel_size, no padding) — same as the spec.
    layer = MaxPoolLayer(kernel_size=kernel_size, input_len=L)
    y = jax.block_until_ready(layer(x))
    assert y.shape == (N, C, layer.output_len), y.shape
    y_ref = _reference_maxpool1d(x, kernel_size, kernel_size, 0)
    np.testing.assert_allclose(np.asarray(y), np.asarray(y_ref), rtol=0, atol=0)

    # Padded config: exercises the in-wrapper -inf fill (no separate pad pass).
    layer_p = MaxPoolLayer(kernel_size=2, input_len=L, stride=2, padding=1)
    y_p = jax.block_until_ready(layer_p(x))
    y_p_ref = _reference_maxpool1d(x, 2, 2, 1)
    np.testing.assert_allclose(np.asarray(y_p), np.asarray(y_p_ref), rtol=0, atol=0)

    print("KERNEL_OK")
</pallas_src>

<mosaic_0001>
module attributes {stable_mosaic.version = 11 : i64} {
  func.func @_maxpool1d_kernel(%arg0: i32, %arg1: memref<8x256xf32, #tpu.memory_space<vmem>>, %arg2: memref<8x128xf32, #tpu.memory_space<vmem>>) attributes {dimension_semantics = [#tpu.dimension_semantics<parallel>], iteration_bounds = array<i64: 1>, scalar_prefetch = 0 : i64, scratch_operands = 0 : i64, tpu.core_type = #tpu.core_type<tc>, window_params = [{transform_indices = @transform_0, window_bounds = array<i64: 8, 256>}, {transform_indices = @transform_1, window_bounds = array<i64: 8, 128>}]} {
    %c0 = arith.constant 0 : index
    %c0_0 = arith.constant 0 : index
    %0 = vector.load %arg1[%c0, %c0_0] : memref<8x256xf32, #tpu.memory_space<vmem>>, vector<8x128xf32>
    %c0_1 = arith.constant 0 : index
    %c128 = arith.constant 128 : index
    %1 = vector.load %arg1[%c0_1, %c128] : memref<8x256xf32, #tpu.memory_space<vmem>>, vector<8x128xf32>
    %2 = arith.maximumf %0, %1 : vector<8x128xf32>
    %c0_2 = arith.constant 0 : index
    %c0_3 = arith.constant 0 : index
    %3 = vector.load %arg2[%c0_2, %c0_3] : memref<8x128xf32, #tpu.memory_space<vmem>>, vector<8x128xf32>
    tpu.vector_store %arg2[%c0_2, %c0_3], %2 {strides = array<i32>} : memref<8x128xf32, #tpu.memory_space<vmem>>, vector<8x128xf32>,
    return
  }
  func.func @transform_0(%arg0: i32) -> (i32, i32) {
    %c0_i32 = arith.constant 0 : i32
    %c0_i32_0 = arith.constant 0 : i32
    return %arg0, %c0_i32 : i32, i32
  }
  func.func @transform_1(%arg0: i32) -> (i32, i32) {
    %c0_i32 = arith.constant 0 : i32
    %c0_i32_0 = arith.constant 0 : i32
    return %arg0, %c0_i32 : i32, i32
  }
}

</mosaic_0001>

<llo_original>
// kernel: _forward.1
$region0: #{_forward.1}
  #allocation0 [shape = 'u32[]', space=smem, size = 0x4, offset = 0x4, fixed_abs, tag = 'smem constant byte address 0x4 - core index']
  #allocation1 [shape = 'u32[144,128]{1,0:T(1,128)}', space=vmem, size = 0x12000, scoped, tag = 'internal scratch']
  %s0 = inlined_call_operand.vmem [shape: f32[8,256], index: 0, kind: input, shape index: {}]
  %s1 = inlined_call_operand.vmem [shape: f32[8,128], index: 1, kind: output, shape index: {}]
  %s2 = sld [smem:[#allocation0]]
  $region14: #{_forward.1} parent=0
    _
  %s4 = ssub.s32 1, %s2
  %s5 = scalar_select 0, %s4, %s2
  // Predicated region
  $region2: #{_forward.1} parent=0 // pred_check
    _
  $region3: #{_forward.1} parent=0 // pred_check_branch
    %7 = sbr.rel (0) target = $region5
  $region4: #{_forward.1} parent=0 // pred_region
    _
  $region5: #{_forward.1} parent=0 // pred_fallthru
    _
  %v8 = vld [vmem:[%s0] sm:$0xff]
  %v9 = vld [vmem:[%s0 + $0x8] sm:$0xff]
  %v10 = vmax.f32 %v8, %v9
  %11 = vst [vmem:[%s1] sm:$0xff] %v10
  // Predicated region
  $region6: #{_forward.1} parent=0 // pred_check
    _
  $region7: #{_forward.1} parent=0 // pred_check_branch
    %13 = sbr.rel (0) target = $region9
  $region8: #{_forward.1} parent=0 // pred_region
    _
  $region9: #{_forward.1} parent=0 // pred_fallthru
    _
  // Predicated region
  $region10: #{_forward.1} parent=0 // pred_check
    _
  $region11: #{_forward.1} parent=0 // pred_check_branch
    %15 = sbr.rel (0) target = $region13
  $region12: #{_forward.1} parent=0 // pred_region
    _
  $region13: #{_forward.1} parent=0 // pred_fallthru
    _

</llo_original>
